<compile_context>
chip_gen: v6e
topology: v6e:2x2x1
jax: 0.10.0
libtpu: 0.0.40
codegen_flags: <defaults>
</compile_context>

<pallas_src>
import functools

import jax
import jax.numpy as jnp
from jax.experimental import pallas as pl
from jax.experimental.pallas import tpu as pltpu


# -------------------------- Pallas kernel (hot path) -------------------------

def _reward_kernel(ids_ref, emb_ref, w1_ref, b1_ref, w2s_ref, b2_ref, out_ref,
                   *, tb, seq_len, vocab):
    """Fused reward head for one batch tile (grid = (batch tiles,)).

    ids_ref : (TB*S, 1)   int32  token ids (row = t*S + s)
    emb_ref : (V, D)      bf16   embedding table, VMEM-resident
    w1_ref  : (D, H)      bf16   first-layer weights, VMEM-resident
    b1_ref  : (1, H)      f32
    w2s_ref : (1, H)      f32    w2 pre-scaled by 1/seq_len (mean folded in)
    b2_ref  : (1, 1)      f32    SMEM scalar
    out_ref : (TB, 128)   f32    reward broadcast along lanes (column 0 used)
    """
    rows = tb * seq_len
    ids = ids_ref[...]                                              # (rows, 1)

    # Embedding gather on the MXU: one-hot(ids) @ emb (exact for 0/1 weights).
    tok_iota = jax.lax.broadcasted_iota(jnp.int32, (rows, vocab), 1)
    onehot = (tok_iota == ids).astype(jnp.bfloat16)                 # (rows, V)
    x = jnp.dot(onehot, emb_ref[...],
                preferred_element_type=jnp.float32)                 # (rows, D)
    x = x.astype(jnp.bfloat16)                                      # lossless

    # First layer on the MXU: bf16 operands, f32 accumulation.
    h = jnp.dot(x, w1_ref[...], preferred_element_type=jnp.float32)  # (rows, H)
    h = jnp.maximum(h + b1_ref[...], 0.0)

    # Mean over the sequence axis: sublane reduction (1/S already in w2s).
    pooled = jnp.sum(h.reshape(tb, seq_len, -1), axis=1)            # (TB, H)

    # Final projection as a lane reduction against the scaled w2 row.
    r = jnp.sum(pooled * w2s_ref[...], axis=1, keepdims=True) + b2_ref[0, 0]

    # Lane-dense (TB, 128) store; wrapper slices column 0.
    out_ref[...] = jnp.broadcast_to(r, out_ref.shape)


def reward_head_pallas(ids_flat, emb, w1, b1, w2_scaled, b2, *, seq_len, tb):
    """ids_flat: (B_pad*S, 1) i32, emb: (V, D) bf16, w1: (D, H) bf16,
    b1 / w2_scaled: (1, H) f32, b2: (1, 1) f32.

    Returns a (B_pad, 128) f32 slab; column 0 holds the rewards.
    """
    rows = ids_flat.shape[0]
    vocab, d = emb.shape
    hdim = w1.shape[1]
    assert rows % (tb * seq_len) == 0, "batch must be padded to the batch tile"
    assert (tb % 8 == 0) and (seq_len % 8 == 0), "sublane alignment"
    assert d % 128 == 0 and hdim % 128 == 0, "D and H must be lane-aligned"
    nb = rows // (tb * seq_len)

    kernel = functools.partial(_reward_kernel, tb=tb, seq_len=seq_len,
                               vocab=vocab)
    return pl.pallas_call(
        kernel,
        out_shape=jax.ShapeDtypeStruct((nb * tb, 128), jnp.float32),
        grid_spec=pltpu.PrefetchScalarGridSpec(
            num_scalar_prefetch=0,
            grid=(nb,),
            in_specs=[
                pl.BlockSpec((tb * seq_len, 1), lambda i: (i, 0)),   # token ids
                pl.BlockSpec((vocab, d), lambda i: (0, 0)),          # emb (resident)
                pl.BlockSpec((d, hdim), lambda i: (0, 0)),           # W1 (resident)
                pl.BlockSpec((1, hdim), lambda i: (0, 0)),           # b1
                pl.BlockSpec((1, hdim), lambda i: (0, 0)),           # w2 / S
                pl.BlockSpec(memory_space=pltpu.MemorySpace.SMEM),   # b2
            ],
            out_specs=pl.BlockSpec((tb, 128), lambda i: (i, 0)),
        ),
        compiler_params=pltpu.CompilerParams(
            dimension_semantics=("parallel",)),
    )(ids_flat, emb, w1, b1, w2_scaled, b2)


# ------------------ jitted glue: flatten ids -> fused kernel ------------------

@functools.partial(jax.jit, static_argnames=("seq_len", "tb"))
def _score_tokens(token_ids, emb, w1, b1, w2_scaled, b2, *, seq_len, tb):
    b_pad = token_ids.shape[0]
    ids_flat = token_ids.reshape(b_pad * seq_len, 1)        # int32, lane-dense
    out = reward_head_pallas(ids_flat, emb, w1, b1, w2_scaled, b2,
                             seq_len=seq_len, tb=tb)
    return out[:, 0]                                         # (B_pad,) f32


# ------------------------------ "LLM" reward model ---------------------------

class LLMRewardModelPallas:
    """JAX/Pallas stand-in for LLMRewardModel.

    Deterministic char-hash tokenizer; the "LLM" is a synthetic embedding + MLP
    reward head whose hot path runs in a single fused Pallas kernel.
    """

    def __init__(self, reward_prompt_template, *, vocab=256, seq_len=8,
                 d_model=128, hidden=128, tb_max=32, key=None):
        assert d_model % 128 == 0 and hidden % 128 == 0 and vocab % 8 == 0
        self.reward_prompt_template = reward_prompt_template
        self.vocab = vocab
        # seq_len padded to a multiple of 8 -> sublane-aligned in-kernel pool.
        self.seq_len = -(-seq_len // 8) * 8
        self.tb_max = tb_max
        key = jax.random.PRNGKey(0) if key is None else key
        k_emb, k_w1, k_w2 = jax.random.split(key, 3)
        # Deterministic synthetic parameters, stored ONCE in their kernel
        # dtypes (bf16 for MXU operands; no per-call casts or HBM rewrites).
        emb = jax.random.normal(k_emb, (vocab, d_model), jnp.float32) * 0.1
        w1 = jax.random.normal(k_w1, (d_model, hidden), jnp.float32) * 0.1
        self.embedding_bf16 = emb.astype(jnp.bfloat16)
        self.w1_bf16 = w1.astype(jnp.bfloat16)
        self.b1 = jnp.zeros((1, hidden), jnp.float32)
        self.w2_row = jax.random.normal(k_w2, (1, hidden), jnp.float32) * 0.1
        self.w2_scaled = self.w2_row * (1.0 / self.seq_len)   # fold mean into w2
        self.b2 = jnp.zeros((1, 1), jnp.float32)

    # ---- deterministic "tokenizer" (host glue; no Pallas equivalent) ----
    def _tokenize(self, text):
        ids = [(ord(c) % self.vocab) for c in text][: self.seq_len]
        return ids + [0] * (self.seq_len - len(ids))

    def _token_ids(self, states, actions):
        prompts = []
        for i, state in enumerate(states):
            action = actions[i] if actions is not None else ''
            prompts.append(
                self.reward_prompt_template.format(state=state, action=action))
        return jnp.asarray([self._tokenize(p) for p in prompts], dtype=jnp.int32)

    def _choose_tb(self, b):
        """Batch tile: tiny batches pad only to a multiple of 8 (one tile);
        large batches use tb_max rows so TB*S fills the MXU and nb >= 2
        ("parallel" axis shards across both v7x TensorCores)."""
        b8 = -(-b // 8) * 8
        return b8 if b8 <= self.tb_max else self.tb_max

    def forward(self, states, actions=None):
        token_ids = self._token_ids(states, actions)               # (B, S)
        b = token_ids.shape[0]
        tb = self._choose_tb(b)
        b_pad = -(-b // tb) * tb
        if b_pad != b:
            # Padded rows score token-id 0 garbage; they are sliced off below.
            pad = jnp.zeros((b_pad - b, self.seq_len), jnp.int32)
            token_ids = jnp.concatenate([token_ids, pad], axis=0)
        rewards = _score_tokens(token_ids, self.embedding_bf16, self.w1_bf16,
                                self.b1, self.w2_scaled, self.b2,
                                seq_len=self.seq_len, tb=tb)
        return rewards[:b]                                          # f32 (B,)

    __call__ = forward

    # Pure-JAX reference for validation (same bf16 matmuls, f32 accumulation).
    def reference_forward(self, states, actions=None):
        token_ids = self._token_ids(states, actions)
        x = jnp.take(self.embedding_bf16, token_ids, axis=0)        # (B, S, D)
        h = jnp.einsum("bsd,dh->bsh", x, self.w1_bf16,
                       preferred_element_type=jnp.float32)
        h = jnp.maximum(h + self.b1, 0.0)
        pooled = jnp.mean(h, axis=1)
        r = jnp.sum(pooled * self.w2_row, axis=-1) + self.b2[0, 0]
        return r.astype(jnp.float32)


# ------------------------------------ main ------------------------------------

if __name__ == "__main__":
    key = jax.random.PRNGKey(0)
    model = LLMRewardModelPallas(
        reward_prompt_template="Rate the response.\nState: {state}\nAction: {action}\nScore:",
        vocab=256, seq_len=8, d_model=128, hidden=128, key=key,
    )

    states = ["What is 2+2?", "Summarize the article."]
    actions = ["The answer is 4.", "It is about TPUs."]

    rewards = jax.block_until_ready(model(states, actions))
    assert rewards.shape == (2,) and rewards.dtype == jnp.float32
    assert bool(jnp.all(jnp.isfinite(rewards)))

    ref = jax.block_until_ready(model.reference_forward(states, actions))
    assert bool(jnp.allclose(rewards, ref, atol=1e-3, rtol=1e-3))

    print("KERNEL_OK")
</pallas_src>

<mosaic_0001>
module attributes {stable_mosaic.version = 11 : i64} {
  func.func @_reward_kernel(%arg0: i32, %arg1: memref<64x1xi32, #tpu.memory_space<vmem>>, %arg2: memref<256x128xbf16, #tpu.memory_space<vmem>>, %arg3: memref<128x128xbf16, #tpu.memory_space<vmem>>, %arg4: memref<1x128xf32, #tpu.memory_space<vmem>>, %arg5: memref<1x128xf32, #tpu.memory_space<vmem>>, %arg6: memref<1x1xf32, #tpu.memory_space<smem>>, %arg7: memref<8x128xf32, #tpu.memory_space<vmem>>) attributes {dimension_semantics = [#tpu.dimension_semantics<parallel>], iteration_bounds = array<i64: 1>, scalar_prefetch = 0 : i64, scratch_operands = 0 : i64, tpu.core_type = #tpu.core_type<tc>, window_params = [{transform_indices = @transform_0, window_bounds = array<i64: 64, 1>}, {pipeline_mode = #tpu.pipeline_mode<synchronous>, transform_indices = @transform_1, window_bounds = array<i64: 256, 128>}, {pipeline_mode = #tpu.pipeline_mode<synchronous>, transform_indices = @transform_2, window_bounds = array<i64: 128, 128>}, {pipeline_mode = #tpu.pipeline_mode<synchronous>, transform_indices = @transform_3, window_bounds = array<i64: 1, 128>}, {pipeline_mode = #tpu.pipeline_mode<synchronous>, transform_indices = @transform_4, window_bounds = array<i64: 1, 128>}, {transform_indices = @transform_5, window_bounds = array<i64: 1, 1>}, {transform_indices = @transform_6, window_bounds = array<i64: 8, 128>}]} {
    %c0 = arith.constant 0 : index
    %c0_0 = arith.constant 0 : index
    %0 = vector.load %arg1[%c0, %c0_0] : memref<64x1xi32, #tpu.memory_space<vmem>>, vector<64x1xi32>
    %1 = tpu.iota {dimensions = array<i32: 1>} : vector<64x256xi32>
    %2 = vector.broadcast %0 : vector<64x1xi32> to vector<64x256xi32>
    %3 = arith.cmpi eq, %1, %2 : vector<64x256xi32>
    %4 = arith.extui %3 : vector<64x256xi1> to vector<64x256xi32>
    %5 = arith.sitofp %4 : vector<64x256xi32> to vector<64x256xf32>
    %6 = arith.truncf %5 : vector<64x256xf32> to vector<64x256xbf16>
    %c0_1 = arith.constant 0 : index
    %c0_2 = arith.constant 0 : index
    %7 = vector.load %arg2[%c0_1, %c0_2] : memref<256x128xbf16, #tpu.memory_space<vmem>>, vector<256x128xbf16>
    %cst = arith.constant dense<0.000000e+00> : vector<64x128xf32>
    %8 = tpu.matmul %6, %7, %cst {dimension_numbers = #tpu.dot_dimension_numbers<[1], [0], [0], [1], [0, 0, 1, 1], [], []>} : vector<64x256xbf16>, vector<256x128xbf16>, vector<64x128xf32> -> vector<64x128xf32>
    %9 = arith.truncf %8 : vector<64x128xf32> to vector<64x128xbf16>
    %c0_3 = arith.constant 0 : index
    %c0_4 = arith.constant 0 : index
    %10 = vector.load %arg3[%c0_3, %c0_4] : memref<128x128xbf16, #tpu.memory_space<vmem>>, vector<128x128xbf16>
    %cst_5 = arith.constant dense<0.000000e+00> : vector<64x128xf32>
    %11 = tpu.matmul %9, %10, %cst_5 {dimension_numbers = #tpu.dot_dimension_numbers<[1], [0], [0], [1], [0, 0, 1, 1], [], []>} : vector<64x128xbf16>, vector<128x128xbf16>, vector<64x128xf32> -> vector<64x128xf32>
    %c0_6 = arith.constant 0 : index
    %c0_7 = arith.constant 0 : index
    %12 = vector.load %arg4[%c0_6, %c0_7] : memref<1x128xf32, #tpu.memory_space<vmem>>, vector<1x128xf32>
    %13 = vector.broadcast %12 : vector<1x128xf32> to vector<64x128xf32>
    %14 = arith.addf %11, %13 : vector<64x128xf32>
    %cst_8 = arith.constant 0.000000e+00 : f32
    %15 = vector.broadcast %cst_8 : f32 to vector<64x128xf32>
    %16 = arith.maximumf %14, %15 : vector<64x128xf32>
    %17 = vector.shape_cast %16 : vector<64x128xf32> to vector<8x8x128xf32>
    %cst_9 = arith.constant dense<0.000000e+00> : vector<8x128xf32>
    %18 = vector.multi_reduction <add>, %17, %cst_9 [1] : vector<8x8x128xf32> to vector<8x128xf32>
    %c0_10 = arith.constant 0 : index
    %c0_11 = arith.constant 0 : index
    %19 = vector.load %arg5[%c0_10, %c0_11] : memref<1x128xf32, #tpu.memory_space<vmem>>, vector<1x128xf32>
    %20 = vector.broadcast %19 : vector<1x128xf32> to vector<8x128xf32>
    %21 = arith.mulf %18, %20 : vector<8x128xf32>
    %cst_12 = arith.constant dense<0.000000e+00> : vector<8xf32>
    %22 = vector.multi_reduction <add>, %21, %cst_12 [1] : vector<8x128xf32> to vector<8xf32>
    %23 = vector.shape_cast %22 : vector<8xf32> to vector<8x1xf32>
    %c0_13 = arith.constant 0 : index
    %c0_14 = arith.constant 0 : index
    %24 = memref.load %arg6[%c0_13, %c0_14] : memref<1x1xf32, #tpu.memory_space<smem>>
    %25 = vector.broadcast %24 : f32 to vector<8x1xf32>
    %26 = arith.addf %23, %25 : vector<8x1xf32>
    %27 = vector.shape_cast %26 : vector<8x1xf32> to vector<8x1xf32>
    %28 = vector.broadcast %27 : vector<8x1xf32> to vector<8x128xf32>
    %c0_15 = arith.constant 0 : index
    %c0_16 = arith.constant 0 : index
    %29 = vector.load %arg7[%c0_15, %c0_16] : memref<8x128xf32, #tpu.memory_space<vmem>>, vector<8x128xf32>
    tpu.vector_store %arg7[%c0_15, %c0_16], %28 {strides = array<i32>} : memref<8x128xf32, #tpu.memory_space<vmem>>, vector<8x128xf32>,
    return
  }
  func.func @transform_0(%arg0: i32) -> (i32, i32) {
    %c0_i32 = arith.constant 0 : i32
    %c0_i32_0 = arith.constant 0 : i32
    return %arg0, %c0_i32 : i32, i32
  }
  func.func @transform_1(%arg0: i32) -> (i32, i32) {
    %c0_i32 = arith.constant 0 : i32
    %c0_i32_0 = arith.constant 0 : i32
    %c0_i32_1 = arith.constant 0 : i32
    return %c0_i32, %c0_i32_0 : i32, i32
  }
  func.func @transform_2(%arg0: i32) -> (i32, i32) {
    %c0_i32 = arith.constant 0 : i32
    %c0_i32_0 = arith.constant 0 : i32
    %c0_i32_1 = arith.constant 0 : i32
    return %c0_i32, %c0_i32_0 : i32, i32
  }
  func.func @transform_3(%arg0: i32) -> (i32, i32) {
    %c0_i32 = arith.constant 0 : i32
    %c0_i32_0 = arith.constant 0 : i32
    %c0_i32_1 = arith.constant 0 : i32
    return %c0_i32, %c0_i32_0 : i32, i32
  }
  func.func @transform_4(%arg0: i32) -> (i32, i32) {
    %c0_i32 = arith.constant 0 : i32
    %c0_i32_0 = arith.constant 0 : i32
    %c0_i32_1 = arith.constant 0 : i32
    return %c0_i32, %c0_i32_0 : i32, i32
  }
  func.func @transform_5(%arg0: i32) -> (i32, i32) {
    %c0_i32 = arith.constant 0 : i32
    %c0_i32_0 = arith.constant 0 : i32
    %c0_i32_1 = arith.constant 0 : i32
    return %c0_i32, %c0_i32_0 : i32, i32
  }
  func.func @transform_6(%arg0: i32) -> (i32, i32) {
    %c0_i32 = arith.constant 0 : i32
    %c0_i32_0 = arith.constant 0 : i32
    return %arg0, %c0_i32 : i32, i32
  }
}

</mosaic_0001>

<llo_original>
// kernel: _score_tokens.1
$region0: #{_score_tokens.1}
  #allocation0 [shape = 'u32[]', space=smem, size = 0x4, offset = 0x4, fixed_abs, tag = 'smem constant byte address 0x4 - core index']
  #allocation1 [shape = 'u32[144,128]{1,0:T(1,128)}', space=vmem, size = 0x12000, scoped, tag = 'internal scratch']
  #allocation2 [shape = 'f32[1,1]{1,0:T(1,128)S(6)}', space=smem, size = 0x200, scoped, tag = 'scoped memory for _score_tokens.1']
  %s0 = inlined_call_operand.vmem [shape: s32[64,1], index: 0, kind: input, shape index: {}]
  %s1 = inlined_call_operand.hbm [shape: bf16[256,128], index: 1, kind: input, shape index: {}]
  %s2 = inlined_call_operand.vmem [shape: bf16[128,128], index: 2, kind: input, shape index: {}]
  %s3 = inlined_call_operand.vmem [shape: f32[1,128], index: 3, kind: input, shape index: {}]
  %s4 = inlined_call_operand.vmem [shape: f32[1,128], index: 4, kind: input, shape index: {}]
  %s5 = inlined_call_operand.<no memory space> [shape: f32[1,1], index: 5, kind: input, shape index: {}]
  %s6 = inlined_call_operand.vmem [shape: f32[8,128], index: 6, kind: output, shape index: {}]
  %s7 = sld [smem:[#allocation0]]
  $region38: #{_score_tokens.1} parent=0
    _
  %s9 = ssub.s32 1, %s7
  %s10 = scalar_select 0, %s9, %s7
  %11 = sst [smem:[#allocation2]] %s5
  $region1: #{_score_tokens.1} parent=0
    #allocation3 [shape = 'u8[65536]{0}', space=vmem, size = 0x10000, scoped, tag = 'input window, operand 1, single buffered']
    #allocation4 [shape = 's32[1]{0}', space=sflag, size = 0x4, scoped, tag = 'scoped memory for _score_tokens.1']
    %12 = vsyncpa [#allocation4], 0
    // Predicated region
    $region2: #{_score_tokens.1} parent=1 // pred_check
      _
    $region3: #{_score_tokens.1} parent=1 // pred_check_branch
      %14 = sbr.rel (0) target = $region5
    $region4: #{_score_tokens.1} parent=1 // pred_region
      _
    $region5: #{_score_tokens.1} parent=1 // pred_fallthru
      _
    // Predicated region
    $region6: #{_score_tokens.1} parent=1 // pred_check
      _
    $region7: #{_score_tokens.1} parent=1 // pred_check_branch
      %16 = sbr.rel (0) target = $region9
    $region8: #{_score_tokens.1} parent=1 // pred_region
      %s18 = ssub.s32 2048, 2048
      %19 = vsyncadd [#allocation4], %s18
      %s20 = sshll.u32 [#allocation3], 4
      %s21 = int_to_ptr.vmem [resolvable:$true] %s20
      %26 = dma.hbm_to_vmem [thread:$0]  %s1, 2048, %s21, [#allocation4], 64, 64, 4
    $region9: #{_score_tokens.1} parent=1 // pred_fallthru
      _
    // Predicated region
    $region10: #{_score_tokens.1} parent=1 // pred_check
      _
    $region11: #{_score_tokens.1} parent=1 // pred_check_branch
      %28 = sbr.rel (0) target = $region13
    $region12: #{_score_tokens.1} parent=1 // pred_region
      _
    $region13: #{_score_tokens.1} parent=1 // pred_fallthru
      _
    // Predicated region
    $region14: #{_score_tokens.1} parent=1 // pred_check
      _
    $region15: #{_score_tokens.1} parent=1 // pred_check_branch
      %30 = sbr.rel (0) target = $region17
    $region16: #{_score_tokens.1} parent=1 // pred_region
      _
    $region17: #{_score_tokens.1} parent=1 // pred_fallthru
      _
    // Predicated region
    $region18: #{_score_tokens.1} parent=1 // pred_check
      _
    $region19: #{_score_tokens.1} parent=1 // pred_check_branch
      %32 = sbr.rel (0) target = $region21
    $region20: #{_score_tokens.1} parent=1 // pred_region
      _
    $region21: #{_score_tokens.1} parent=1 // pred_fallthru
      _
    // Predicated region
    $region22: #{_score_tokens.1} parent=1 // pred_check
      _
    $region23: #{_score_tokens.1} parent=1 // pred_check_branch
      %34 = sbr.rel (0) target = $region25
    $region24: #{_score_tokens.1} parent=1 // pred_region
      _
    $region25: #{_score_tokens.1} parent=1 // pred_fallthru
      _
    // Predicated region
    $region26: #{_score_tokens.1} parent=1 // pred_check
      _
    $region27: #{_score_tokens.1} parent=1 // pred_check_branch
      %36 = sbr.rel (0) target = $region29
    $region28: #{_score_tokens.1} parent=1 // pred_region
      %37 = dma.done [#allocation4], 2048
    $region29: #{_score_tokens.1} parent=1 // pred_fallthru
      _
    %v39 = vld [vmem:[%s0] sm:$0xff]
    %v40 = vld [vmem:[%s0 + $0x8] sm:$0xff]
    %v41 = vld [vmem:[%s0 + $0x10] sm:$0xff]
    %v42 = vld [vmem:[%s0 + $0x18] sm:$0xff]
    %v43 = vld [vmem:[%s0 + $0x20] sm:$0xff]
    %v44 = vld [vmem:[%s0 + $0x28] sm:$0xff]
    %v45 = vld [vmem:[%s0 + $0x30] sm:$0xff]
    %v46 = vld [vmem:[%s0 + $0x38] sm:$0xff]
    %v47 = vlaneseq
    %v48 = vand.u32 %v47, 127
    %v49 = vadd.s32 %v48, 128
    %50 = vset.pattern.permute.xlu0 0
    %51 = vperm.xlu0 %50, %v39
    %v52 = vpop.permute.xlu0 %51
    %53 = vset.pattern.permute.xlu0 0
    %54 = vperm.xlu0 %53, %v40
    %v55 = vpop.permute.xlu0 %54
    %56 = vset.pattern.permute.xlu0 0
    %57 = vperm.xlu0 %56, %v41
    %v58 = vpop.permute.xlu0 %57
    %59 = vset.pattern.permute.xlu0 0
    %60 = vperm.xlu0 %59, %v42
    %v61 = vpop.permute.xlu0 %60
    %62 = vset.pattern.permute.xlu0 0
    %63 = vperm.xlu0 %62, %v43
    %v64 = vpop.permute.xlu0 %63
    %65 = vset.pattern.permute.xlu0 0
    %66 = vperm.xlu0 %65, %v44
    %v67 = vpop.permute.xlu0 %66
    %68 = vset.pattern.permute.xlu0 0
    %69 = vperm.xlu0 %68, %v45
    %v70 = vpop.permute.xlu0 %69
    %71 = vset.pattern.permute.xlu0 0
    %72 = vperm.xlu0 %71, %v46
    %v73 = vpop.permute.xlu0 %72
    %vm74 = vcmp.eq.s32.totalorder %v48, %v52
    %vm75 = vcmp.eq.s32.totalorder %v49, %v52
    %vm76 = vcmp.eq.s32.totalorder %v48, %v55
    %vm77 = vcmp.eq.s32.totalorder %v49, %v55
    %vm78 = vcmp.eq.s32.totalorder %v48, %v58
    %vm79 = vcmp.eq.s32.totalorder %v49, %v58
    %vm80 = vcmp.eq.s32.totalorder %v48, %v61
    %vm81 = vcmp.eq.s32.totalorder %v49, %v61
    %vm82 = vcmp.eq.s32.totalorder %v48, %v64
    %vm83 = vcmp.eq.s32.totalorder %v49, %v64
    %vm84 = vcmp.eq.s32.totalorder %v48, %v67
    %vm85 = vcmp.eq.s32.totalorder %v49, %v67
    %vm86 = vcmp.eq.s32.totalorder %v48, %v70
    %vm87 = vcmp.eq.s32.totalorder %v49, %v70
    %vm88 = vcmp.eq.s32.totalorder %v48, %v73
    %vm89 = vcmp.eq.s32.totalorder %v49, %v73
    %v90 = vsel %vm74, 1, 0
    %v91 = vsel %vm75, 1, 0
    %v92 = vsel %vm76, 1, 0
    %v93 = vsel %vm77, 1, 0
    %v94 = vsel %vm78, 1, 0
    %v95 = vsel %vm79, 1, 0
    %v96 = vsel %vm80, 1, 0
    %v97 = vsel %vm81, 1, 0
    %v98 = vsel %vm82, 1, 0
    %v99 = vsel %vm83, 1, 0
    %v100 = vsel %vm84, 1, 0
    %v101 = vsel %vm85, 1, 0
    %v102 = vsel %vm86, 1, 0
    %v103 = vsel %vm87, 1, 0
    %v104 = vsel %vm88, 1, 0
    %v105 = vsel %vm89, 1, 0
    %v106 = vcvt.s32.f32 %v90
    %v107 = vcvt.s32.f32 %v91
    %v108 = vcvt.s32.f32 %v92
    %v109 = vcvt.s32.f32 %v93
    %v110 = vcvt.s32.f32 %v94
    %v111 = vcvt.s32.f32 %v95
    %v112 = vcvt.s32.f32 %v96
    %v113 = vcvt.s32.f32 %v97
    %v114 = vcvt.s32.f32 %v98
    %v115 = vcvt.s32.f32 %v99
    %v116 = vcvt.s32.f32 %v100
    %v117 = vcvt.s32.f32 %v101
    %v118 = vcvt.s32.f32 %v102
    %v119 = vcvt.s32.f32 %v103
    %v120 = vcvt.s32.f32 %v104
    %v121 = vcvt.s32.f32 %v105
    %v122 = vpack.c.bf16 %v108, %v106
    %v123 = vpack.c.bf16 %v109, %v107
    %v124 = vpack.c.bf16 %v112, %v110
    %v125 = vpack.c.bf16 %v113, %v111
    %v126 = vpack.c.bf16 %v116, %v114
    %v127 = vpack.c.bf16 %v117, %v115
    %v128 = vpack.c.bf16 %v120, %v118
    %v129 = vpack.c.bf16 %v121, %v119
    %v130 = vld [vmem:[#allocation3] sm:$0xf]
    %v131 = vld [vmem:[#allocation3 + $0x4] sm:$0xf]
    %v132 = vld [vmem:[#allocation3 + $0x8] sm:$0xf]
    %v133 = vld [vmem:[#allocation3 + $0xc] sm:$0xf]
    %v134 = vld [vmem:[#allocation3 + $0x10] sm:$0xf]
    %v135 = vld [vmem:[#allocation3 + $0x14] sm:$0xf]
    %v136 = vld [vmem:[#allocation3 + $0x18] sm:$0xf]
    %v137 = vld [vmem:[#allocation3 + $0x1c] sm:$0xf]
    %v138 = vld [vmem:[#allocation3 + $0x20] sm:$0xf]
    %v139 = vld [vmem:[#allocation3 + $0x24] sm:$0xf]
    %v140 = vld [vmem:[#allocation3 + $0x28] sm:$0xf]
    %v141 = vld [vmem:[#allocation3 + $0x2c] sm:$0xf]
    %v142 = vld [vmem:[#allocation3 + $0x30] sm:$0xf]
    %v143 = vld [vmem:[#allocation3 + $0x34] sm:$0xf]
    %v144 = vld [vmem:[#allocation3 + $0x38] sm:$0xf]
    %v145 = vld [vmem:[#allocation3 + $0x3c] sm:$0xf]
    %v146 = vld [vmem:[#allocation3 + $0x40] sm:$0xf]
    %v147 = vld [vmem:[#allocation3 + $0x44] sm:$0xf]
    %v148 = vld [vmem:[#allocation3 + $0x48] sm:$0xf]
    %v149 = vld [vmem:[#allocation3 + $0x4c] sm:$0xf]
    %v150 = vld [vmem:[#allocation3 + $0x50] sm:$0xf]
    %v151 = vld [vmem:[#allocation3 + $0x54] sm:$0xf]
    %v152 = vld [vmem:[#allocation3 + $0x58] sm:$0xf]
    %v153 = vld [vmem:[#allocation3 + $0x5c] sm:$0xf]
    %v154 = vld [vmem:[#allocation3 + $0x60] sm:$0xf]
    %v155 = vld [vmem:[#allocation3 + $0x64] sm:$0xf]
    %v156 = vld [vmem:[#allocation3 + $0x68] sm:$0xf]
    %v157 = vld [vmem:[#allocation3 + $0x6c] sm:$0xf]
    %v158 = vld [vmem:[#allocation3 + $0x70] sm:$0xf]
    %v159 = vld [vmem:[#allocation3 + $0x74] sm:$0xf]
    %v160 = vld [vmem:[#allocation3 + $0x78] sm:$0xf]
    %v161 = vld [vmem:[#allocation3 + $0x7c] sm:$0xf]
    %v194 = vunpack.c.l.b16 %v130
    %v195 = vunpack.c.l.b16 %v131
    %v196 = vunpack.c.l.b16 %v132
    %v197 = vunpack.c.l.b16 %v133
    %v198 = vunpack.c.l.b16 %v134
    %v199 = vunpack.c.l.b16 %v135
    %v200 = vunpack.c.l.b16 %v136
    %v201 = vunpack.c.l.b16 %v137
    %v202 = vunpack.c.l.b16 %v138
    %v203 = vunpack.c.l.b16 %v139
    %v204 = vunpack.c.l.b16 %v140
    %v205 = vunpack.c.l.b16 %v141
    %v206 = vunpack.c.l.b16 %v142
    %v207 = vunpack.c.l.b16 %v143
    %v208 = vunpack.c.l.b16 %v144
    %v209 = vunpack.c.l.b16 %v145
    %v210 = vunpack.c.l.b16 %v146
    %v211 = vunpack.c.l.b16 %v147
    %v212 = vunpack.c.l.b16 %v148
    %v213 = vunpack.c.l.b16 %v149
    %v214 = vunpack.c.l.b16 %v150
    %v215 = vunpack.c.l.b16 %v151
    %v216 = vunpack.c.l.b16 %v152
    %v217 = vunpack.c.l.b16 %v153
    %v218 = vunpack.c.l.b16 %v154
    %v219 = vunpack.c.l.b16 %v155
    %v220 = vunpack.c.l.b16 %v156
    %v221 = vunpack.c.l.b16 %v157
    %v222 = vunpack.c.l.b16 %v158
    %v223 = vunpack.c.l.b16 %v159
    %v224 = vunpack.c.l.b16 %v160
    %v225 = vunpack.c.l.b16 %v161
    %v226 = vpack.c.b16 %v195, %v194
    %v227 = vpack.c.b16 %v197, %v196
    %v228 = vpack.c.b16 %v199, %v198
    %v229 = vpack.c.b16 %v201, %v200
    %v230 = vpack.c.b16 %v203, %v202
    %v231 = vpack.c.b16 %v205, %v204
    %v232 = vpack.c.b16 %v207, %v206
    %v233 = vpack.c.b16 %v209, %v208
    %v234 = vpack.c.b16 %v211, %v210
    %v235 = vpack.c.b16 %v213, %v212
    %v236 = vpack.c.b16 %v215, %v214
    %v237 = vpack.c.b16 %v217, %v216
    %v238 = vpack.c.b16 %v219, %v218
    %v239 = vpack.c.b16 %v221, %v220
    %v240 = vpack.c.b16 %v223, %v222
    %v241 = vpack.c.b16 %v225, %v224
    %258 = vmatprep.subr.bf16.mxu0 0
    %259 = vmatpush1.bf16.msra.mxu0 %v233
    %260 = vmatprep.subr.bf16.mxu0 0
    %261 = vmatpush1.bf16.msra.mxu0 %v232
    %262 = vmatprep.subr.bf16.mxu0 0
    %263 = vmatpush1.bf16.msra.mxu0 %v231
    %264 = vmatprep.subr.bf16.mxu0 0
    %265 = vmatpush1.bf16.msra.mxu0 %v230
    %266 = vmatprep.subr.bf16.mxu0 0
    %267 = vmatpush1.bf16.msra.mxu0 %v229
    %268 = vmatprep.subr.bf16.mxu0 0
    %269 = vmatpush1.bf16.msra.mxu0 %v228
    %270 = vmatprep.subr.bf16.mxu0 0
    %271 = vmatpush1.bf16.msra.mxu0 %v227
    %272 = vmatprep.subr.bf16.mxu0 0
    %273 = vmatpush1.bf16.msra.mxu0 %v226
    %274 = vmatprep.subr.bf16.mxu0 0
    %275 = vmatpush2.bf16.msra.mxu0 %v241
    %276 = vmatprep.subr.bf16.mxu0 0
    %277 = vmatpush2.bf16.msra.mxu0 %v240
    %278 = vmatprep.subr.bf16.mxu0 0
    %279 = vmatpush2.bf16.msra.mxu0 %v239
    %280 = vmatprep.subr.bf16.mxu0 0
    %281 = vmatpush2.bf16.msra.mxu0 %v238
    %282 = vmatprep.subr.bf16.mxu0 0
    %283 = vmatpush2.bf16.msra.mxu0 %v237
    %284 = vmatprep.subr.bf16.mxu0 0
    %285 = vmatpush2.bf16.msra.mxu0 %v236
    %286 = vmatprep.subr.bf16.mxu0 0
    %287 = vmatpush2.bf16.msra.mxu0 %v235
    %288 = vmatprep.subr.bf16.mxu0 0
    %289 = vmatpush2.bf16.msra.mxu0 %v234
    %290 = vmatprep.mubr.bf16.mxu0 %v123
    %291 = vmatmul.mubr.bf16.gmra.mxu0 %v122
    %v292 = vpop.f32.mrf.mxu0
    %v293 = vadd.f32 0.0, %v292
    %v294 = vpop.f32.mrf.mxu0
    %v295 = vpop.f32.mrf.mxu0
    %v296 = vadd.f32 0.0, %v295
    %v297 = vpop.f32.mrf.mxu0
    %298 = vmatprep.mubr.bf16.mxu0 %v125
    %299 = vmatmul.mubr.bf16.gmra.mxu0 %v124
    %v300 = vpop.f32.mrf.mxu0
    %v301 = vadd.f32 0.0, %v300
    %v302 = vpop.f32.mrf.mxu0
    %v303 = vpop.f32.mrf.mxu0
    %v304 = vadd.f32 0.0, %v303
    %v305 = vpop.f32.mrf.mxu0
    %306 = vmatprep.mubr.bf16.mxu0 %v127
    %307 = vmatmul.mubr.bf16.gmra.mxu0 %v126
    %v308 = vpop.f32.mrf.mxu0
    %v309 = vadd.f32 0.0, %v308
    %v310 = vpop.f32.mrf.mxu0
    %v311 = vpop.f32.mrf.mxu0
    %v312 = vadd.f32 0.0, %v311
    %v313 = vpop.f32.mrf.mxu0
    %314 = vmatprep.mubr.bf16.mxu0 %v129
    %315 = vmatmul.mubr.bf16.gmra.mxu0 %v128
    %v316 = vpop.f32.mrf.mxu0
    %v317 = vadd.f32 0.0, %v316
    %v318 = vpop.f32.mrf.mxu0
    %v319 = vpop.f32.mrf.mxu0
    %v320 = vadd.f32 0.0, %v319
    %v321 = vpop.f32.mrf.mxu0
    %322 = vdwg.mxu0
    %v323 = vpack.c.bf16 %v296, %v293
    %v324 = vpack.c.bf16 %v304, %v301
    %v325 = vpack.c.bf16 %v312, %v309
    %v326 = vpack.c.bf16 %v320, %v317
    %v327 = vld [vmem:[%s2] sm:$0xf]
    %v328 = vld [vmem:[%s2 + $0x4] sm:$0xf]
    %v329 = vld [vmem:[%s2 + $0x8] sm:$0xf]
    %v330 = vld [vmem:[%s2 + $0xc] sm:$0xf]
    %v331 = vld [vmem:[%s2 + $0x10] sm:$0xf]
    %v332 = vld [vmem:[%s2 + $0x14] sm:$0xf]
    %v333 = vld [vmem:[%s2 + $0x18] sm:$0xf]
    %v334 = vld [vmem:[%s2 + $0x1c] sm:$0xf]
    %v335 = vld [vmem:[%s2 + $0x20] sm:$0xf]
    %v336 = vld [vmem:[%s2 + $0x24] sm:$0xf]
    %v337 = vld [vmem:[%s2 + $0x28] sm:$0xf]
    %v338 = vld [vmem:[%s2 + $0x2c] sm:$0xf]
    %v339 = vld [vmem:[%s2 + $0x30] sm:$0xf]
    %v340 = vld [vmem:[%s2 + $0x34] sm:$0xf]
    %v341 = vld [vmem:[%s2 + $0x38] sm:$0xf]
    %v342 = vld [vmem:[%s2 + $0x3c] sm:$0xf]
    %v343 = vld [vmem:[%s3] sm:$0x1]
    %v345 = vlaneseq
    %v346 = vshrl.u32 %v345, 7
    %v347 = vsub.s32 0, %v346
    %v348 = vrot.slane %v343, %v347
    %v366 = vunpack.c.l.b16 %v327
    %v367 = vunpack.c.l.b16 %v328
    %v368 = vunpack.c.l.b16 %v329
    %v369 = vunpack.c.l.b16 %v330
    %v370 = vunpack.c.l.b16 %v331
    %v371 = vunpack.c.l.b16 %v332
    %v372 = vunpack.c.l.b16 %v333
    %v373 = vunpack.c.l.b16 %v334
    %v374 = vunpack.c.l.b16 %v335
    %v375 = vunpack.c.l.b16 %v336
    %v376 = vunpack.c.l.b16 %v337
    %v377 = vunpack.c.l.b16 %v338
    %v378 = vunpack.c.l.b16 %v339
    %v379 = vunpack.c.l.b16 %v340
    %v380 = vunpack.c.l.b16 %v341
    %v381 = vunpack.c.l.b16 %v342
    %v382 = vpack.c.b16 %v367, %v366
    %v383 = vpack.c.b16 %v369, %v368
    %v384 = vpack.c.b16 %v371, %v370
    %v385 = vpack.c.b16 %v373, %v372
    %v386 = vpack.c.b16 %v375, %v374
    %v387 = vpack.c.b16 %v377, %v376
    %v388 = vpack.c.b16 %v379, %v378
    %v389 = vpack.c.b16 %v381, %v380
    %398 = vmatprep.subr.bf16.mxu0 0
    %399 = vmatpush1.bf16.msra.mxu0 %v389
    %400 = vmatprep.subr.bf16.mxu0 0
    %401 = vmatpush1.bf16.msra.mxu0 %v388
    %402 = vmatprep.subr.bf16.mxu0 0
    %403 = vmatpush1.bf16.msra.mxu0 %v387
    %404 = vmatprep.subr.bf16.mxu0 0
    %405 = vmatpush1.bf16.msra.mxu0 %v386
    %406 = vmatprep.subr.bf16.mxu0 0
    %407 = vmatpush1.bf16.msra.mxu0 %v385
    %408 = vmatprep.subr.bf16.mxu0 0
    %409 = vmatpush1.bf16.msra.mxu0 %v384
    %410 = vmatprep.subr.bf16.mxu0 0
    %411 = vmatpush1.bf16.msra.mxu0 %v383
    %412 = vmatprep.subr.bf16.mxu0 0
    %413 = vmatpush1.bf16.msra.mxu0 %v382
    %414 = vmatprep.subr.bf16.mxu0 0
    %415 = vmatpush2.bf16.msra.mxu0 0
    %416 = vmatprep.subr.bf16.mxu0 0
    %417 = vmatpush2.bf16.msra.mxu0 0
    %418 = vmatprep.subr.bf16.mxu0 0
    %419 = vmatpush2.bf16.msra.mxu0 0
    %420 = vmatprep.subr.bf16.mxu0 0
    %421 = vmatpush2.bf16.msra.mxu0 0
    %422 = vmatprep.subr.bf16.mxu0 0
    %423 = vmatpush2.bf16.msra.mxu0 0
    %424 = vmatprep.subr.bf16.mxu0 0
    %425 = vmatpush2.bf16.msra.mxu0 0
    %426 = vmatprep.subr.bf16.mxu0 0
    %427 = vmatpush2.bf16.msra.mxu0 0
    %428 = vmatprep.subr.bf16.mxu0 0
    %429 = vmatpush2.bf16.msra.mxu0 0
    %430 = vmatprep.mubr.bf16.mxu0 0
    %431 = vmatmul.mubr.bf16.gmra.mxu0 %v323
    %v432 = vpop.f32.mrf.mxu0
    %v433 = vadd.f32 %v348, %v432
    %v434 = vpop.f32.mrf.mxu0
    %v435 = vpop.f32.mrf.mxu0
    %v436 = vadd.f32 %v348, %v435
    %v437 = vpop.f32.mrf.mxu0
    %438 = vmatprep.mubr.bf16.mxu0 0
    %439 = vmatmul.mubr.bf16.gmra.mxu0 %v324
    %v440 = vpop.f32.mrf.mxu0
    %v441 = vadd.f32 %v348, %v440
    %v442 = vpop.f32.mrf.mxu0
    %v443 = vpop.f32.mrf.mxu0
    %v444 = vadd.f32 %v348, %v443
    %v445 = vpop.f32.mrf.mxu0
    %446 = vmatprep.mubr.bf16.mxu0 0
    %447 = vmatmul.mubr.bf16.gmra.mxu0 %v325
    %v448 = vpop.f32.mrf.mxu0
    %v449 = vadd.f32 %v348, %v448
    %v450 = vpop.f32.mrf.mxu0
    %v451 = vpop.f32.mrf.mxu0
    %v452 = vadd.f32 %v348, %v451
    %v453 = vpop.f32.mrf.mxu0
    %454 = vmatprep.mubr.bf16.mxu0 0
    %455 = vmatmul.mubr.bf16.gmra.mxu0 %v326
    %v456 = vpop.f32.mrf.mxu0
    %v457 = vadd.f32 %v348, %v456
    %v458 = vpop.f32.mrf.mxu0
    %v459 = vpop.f32.mrf.mxu0
    %v460 = vadd.f32 %v348, %v459
    %v461 = vpop.f32.mrf.mxu0
    %462 = vdwg.mxu0
    %v463 = vmax.f32 %v433, 0.0
    %v464 = vmax.f32 %v436, 0.0
    %v465 = vmax.f32 %v441, 0.0
    %v466 = vmax.f32 %v444, 0.0
    %v467 = vmax.f32 %v449, 0.0
    %v468 = vmax.f32 %v452, 0.0
    %v469 = vmax.f32 %v457, 0.0
    %v470 = vmax.f32 %v460, 0.0
    %v471 = vrot.slane %v463, 4
    %v472 = vadd.f32 %v463, %v471
    %v473 = vrot.slane %v472, 2
    %v474 = vadd.f32 %v472, %v473
    %v475 = vrot.slane %v474, 1
    %v476 = vadd.f32 %v474, %v475
    %v477 = vrot.slane %v464, 4
    %v478 = vadd.f32 %v464, %v477
    %v479 = vrot.slane %v478, 2
    %v480 = vadd.f32 %v478, %v479
    %v481 = vrot.slane %v480, 1
    %v482 = vadd.f32 %v480, %v481
    %v483 = vrot.slane %v465, 4
    %v484 = vadd.f32 %v465, %v483
    %v485 = vrot.slane %v484, 2
    %v486 = vadd.f32 %v484, %v485
    %v487 = vrot.slane %v486, 1
    %v488 = vadd.f32 %v486, %v487
    %v489 = vrot.slane %v466, 4
    %v490 = vadd.f32 %v466, %v489
    %v491 = vrot.slane %v490, 2
    %v492 = vadd.f32 %v490, %v491
    %v493 = vrot.slane %v492, 1
    %v494 = vadd.f32 %v492, %v493
    %v495 = vrot.slane %v467, 4
    %v496 = vadd.f32 %v467, %v495
    %v497 = vrot.slane %v496, 2
    %v498 = vadd.f32 %v496, %v497
    %v499 = vrot.slane %v498, 1
    %v500 = vadd.f32 %v498, %v499
    %v501 = vrot.slane %v468, 4
    %v502 = vadd.f32 %v468, %v501
    %v503 = vrot.slane %v502, 2
    %v504 = vadd.f32 %v502, %v503
    %v505 = vrot.slane %v504, 1
    %v506 = vadd.f32 %v504, %v505
    %v507 = vrot.slane %v469, 4
    %v508 = vadd.f32 %v469, %v507
    %v509 = vrot.slane %v508, 2
    %v510 = vadd.f32 %v508, %v509
    %v511 = vrot.slane %v510, 1
    %v512 = vadd.f32 %v510, %v511
    %v513 = vrot.slane %v470, 4
    %v514 = vadd.f32 %v470, %v513
    %v515 = vrot.slane %v514, 2
    %v516 = vadd.f32 %v514, %v515
    %v517 = vrot.slane %v516, 1
    %v518 = vadd.f32 %v516, %v517
    %v519 = vld [vmem:[%s4] sm:$0x1]
    %v521 = vlaneseq
    %v522 = vshrl.u32 %v521, 7
    %v523 = vsub.s32 0, %v522
    %v524 = vrot.slane %v519, %v523
    %v526 = vmul.f32 %v476, %v524
    %v527 = vmul.f32 %v482, %v524
    %v528 = vmul.f32 %v488, %v524
    %v529 = vmul.f32 %v494, %v524
    %v530 = vmul.f32 %v500, %v524
    %v531 = vmul.f32 %v506, %v524
    %v532 = vmul.f32 %v512, %v524
    %v533 = vmul.f32 %v518, %v524
    %v542 = vrot.slane %v527, 7
    %vm543 = vcmask 1041409
    %v544 = vsel %vm543, %v542, %v526
    %v545 = vrot.slane %v528, 6
    %vm546 = vcmask 1042434
    %v547 = vsel %vm546, %v545, %v544
    %v548 = vrot.slane %v529, 5
    %vm549 = vcmask 1043459
    %v550 = vsel %vm549, %v548, %v547
    %v551 = vrot.slane %v530, 4
    %vm552 = vcmask 1044484
    %v553 = vsel %vm552, %v551, %v550
    %v554 = vrot.slane %v531, 3
    %vm555 = vcmask 1045509
    %v556 = vsel %vm555, %v554, %v553
    %v557 = vrot.slane %v532, 2
    %vm558 = vcmask 1046534
    %v559 = vsel %vm558, %v557, %v556
    %v560 = vrot.slane %v533, 1
    %vm561 = vcmask 1047559
    %v562 = vsel %vm561, %v560, %v559
    %564 = vadd.xlane.f32.xlu0 %v562
    %v565 = vpop.xlane.xlu0 %564
    %s566 = sld [smem:[#allocation2]]
    %v567 = vstv %s566
    %v568 = vadd.f32 %v565, %v567
    %569 = vst [vmem:[%s6] sm:$0xff] %v568
    // Predicated region
    $region30: #{_score_tokens.1} parent=1 // pred_check
      _
    $region31: #{_score_tokens.1} parent=1 // pred_check_branch
      %571 = sbr.rel (0) target = $region33
    $region32: #{_score_tokens.1} parent=1 // pred_region
      _
    $region33: #{_score_tokens.1} parent=1 // pred_fallthru
      _
    // Predicated region
    $region34: #{_score_tokens.1} parent=1 // pred_check
      _
    $region35: #{_score_tokens.1} parent=1 // pred_check_branch
      %573 = sbr.rel (0) target = $region37
    $region36: #{_score_tokens.1} parent=1 // pred_region
      _
    $region37: #{_score_tokens.1} parent=1 // pred_fallthru
      _
    %574 = vsyncpa [#allocation4], 1

</llo_original>
